<compile_context>
chip_gen: v6e
topology: v6e:2x2x1
jax: 0.10.0
libtpu: 0.0.40
codegen_flags: <defaults>
</compile_context>

<pallas_src>
import jax
import jax.numpy as jnp
from jax.experimental import pallas as pl
from jax.experimental.pallas import tpu as pltpu


def _layerscale_kernel(x_ref, w_ref, b_ref, o_ref):
    # x_ref/o_ref: (TR, TL).  w_ref/b_ref are f32 and either (TR, 1) (per-row
    # params, lane broadcast) or (1, TL) (per-element params, sublane broadcast).
    x = x_ref[...].astype(jnp.float32)
    o_ref[...] = (x * w_ref[...] + b_ref[...]).astype(o_ref.dtype)


def _round_up(a, m):
    return ((a + m - 1) // m) * m


def _budgets(target_block_bytes, vmem_limit_bytes):
    """Per-generation block / scoped-VMEM budgets (double-buffered in+out ~= 4x block)."""
    tb, vl = 4 * 1024 * 1024, 32 * 1024 * 1024  # v5e/v6e-safe defaults
    try:
        info = pltpu.get_tpu_info()
        cap = getattr(info, "vmem_capacity_bytes", None)
        if cap is not None and cap <= 64 * 1024 * 1024:
            # v7x-class: 64 MiB VMEM per TC but ~3.2 TB/s HBM -> bigger steps to
            # amortize the ~0.35 us fixed grid-step overhead.
            tb, vl = 8 * 1024 * 1024, 48 * 1024 * 1024
    except Exception:
        pass
    if target_block_bytes is None:
        target_block_bytes = tb
    if vmem_limit_bytes is None:
        vmem_limit_bytes = vl
    return target_block_bytes, vmem_limit_bytes


def _choose_tiles(R, L, itemsize, sublane, target_block_bytes):
    """Pick (row_tile, lane_tile) for a ~target_block_bytes x block."""
    # Lane tile: keep the full row length when the budget allows at least
    # `sublane` rows; otherwise large multiples of 128 so stores stay lane-dense
    # (unmasked vst on all but the final partial block).
    if L * itemsize * sublane <= target_block_bytes:
        tl = L
    else:
        tl = (target_block_bytes // (sublane * itemsize)) // 128 * 128
        tl = max(128, min(tl, L))

    # Row tile: as many rows as the budget allows, then balanced across blocks
    # so the last block isn't a mostly-masked tail (e.g. 384 rows with a 328-row
    # budget would leave a 56-row block paying a full step of DMA + overhead).
    tr_max = max(sublane, (target_block_bytes // (tl * itemsize)) // sublane * sublane)
    if tr_max >= R:
        tr = R  # full extent -> always a legal block dim
    else:
        n_blocks = pl.cdiv(R, tr_max)
        tr = _round_up(pl.cdiv(R, n_blocks), sublane)  # <= tr_max, so VMEM budget holds
    return tr, tl


def layer_scale(x, weight, bias, *, target_block_bytes=None, vmem_limit_bytes=None,
                donate_x=False):
    """LayerScale forward: out[n,c,h,w] = x[n,c,h,w] * weight[c] + bias[c].

    x: (N, C, H, W); weight: (C, 1, 1, 1) (or anything reshapeable to (C,)); bias: (C,).
    """
    N, C, H, W = x.shape
    hw = H * W
    dtype = x.dtype
    itemsize = jnp.dtype(dtype).itemsize
    sublane = max(8, 32 // itemsize)  # 8 for 32-bit, 16 for bf16, 32 for 8-bit

    target_block_bytes, vmem_limit_bytes = _budgets(target_block_bytes, vmem_limit_bytes)

    # Parameters stay f32 inside the kernel; only the final store casts to x.dtype.
    w_c = weight.reshape(C).astype(jnp.float32)
    b_c = bias.reshape(C).astype(jnp.float32)

    # Layout regimes:
    #  A) hw lane-aligned: rows = N*C (batch folded into the row axis so one
    #     block can span multiple images), lanes = hw; params are (N*C, 1).
    #  B) hw small / misaligned: flatten (C, hw) per image so the last dim is
    #     long and lane-dense; params are pre-expanded per-element (1, C*hw) and
    #     broadcast over the N rows. Only used when the row axis (N) can stay
    #     reasonably sublane-dense or hw is too small for lanes anyway.
    flat_image = (hw % 128 != 0) and (hw < 128 or N >= sublane)
    if flat_image:
        R, L = N, C * hw
        x2d = x.reshape(R, L)
        w2d = jnp.repeat(w_c, hw).reshape(1, L)
        b2d = jnp.repeat(b_c, hw).reshape(1, L)
    else:
        R, L = N * C, hw
        x2d = x.reshape(R, L)
        w2d = jnp.broadcast_to(w_c[None, :], (N, C)).reshape(R, 1)
        b2d = jnp.broadcast_to(b_c[None, :], (N, C)).reshape(R, 1)

    tr, tl = _choose_tiles(R, L, itemsize, sublane, target_block_bytes)

    # v7x has 2 TensorCores; if everything collapsed into a single block but the
    # work is non-trivial, split it so Mosaic can shard the parallel grid across
    # both cores (harmless one extra step on single-core generations).
    if pl.cdiv(R, tr) * pl.cdiv(L, tl) == 1 and R * L * itemsize >= (512 << 10):
        if R >= 2 * sublane:
            tr = _round_up(pl.cdiv(R, 2), sublane)
        elif L >= 2 * 128:
            tl = _round_up(pl.cdiv(L, 2), 128)

    grid = (pl.cdiv(R, tr), pl.cdiv(L, tl))

    if flat_image:
        param_spec = pl.BlockSpec((1, tl), lambda r, s: (0, s))
    else:
        # Lane axis innermost -> the (r, 0) param block index is unchanged across
        # consecutive steps, so Pallas skips re-DMA of the tiny weight/bias blocks.
        param_spec = pl.BlockSpec((tr, 1), lambda r, s: (r, 0))

    out2d = pl.pallas_call(
        _layerscale_kernel,
        out_shape=jax.ShapeDtypeStruct((R, L), dtype),
        grid_spec=pltpu.PrefetchScalarGridSpec(
            num_scalar_prefetch=0,
            grid=grid,
            in_specs=[
                pl.BlockSpec((tr, tl), lambda r, s: (r, s)),
                param_spec,
                param_spec,
            ],
            out_specs=pl.BlockSpec((tr, tl), lambda r, s: (r, s)),
        ),
        compiler_params=pltpu.CompilerParams(
            dimension_semantics=("parallel", "parallel"),
            vmem_limit_bytes=vmem_limit_bytes,
        ),
        # Optional in-place write when the caller donates x (saves the second
        # N*C*H*W HBM allocation; HBM traffic itself is unchanged).
        input_output_aliases=({0: 0} if donate_x else {}),
    )(x2d, w2d, b2d)

    return out2d.reshape(N, C, H, W)


def _reference(x, weight, bias):
    C = x.shape[1]
    w = weight.reshape(1, C, 1, 1).astype(jnp.float32)
    b = bias.reshape(1, C, 1, 1).astype(jnp.float32)
    return (x.astype(jnp.float32) * w + b).astype(x.dtype)


if __name__ == "__main__":
    key = jax.random.PRNGKey(0)
    k1, k2, k3, k4 = jax.random.split(key, 4)

    # --- Case 1: module-default init, lane-aligned spatial (regime A) ---
    N, C, H, W = 2, 4, 16, 16
    init_value = 1e-05
    weight = jnp.ones((C, 1, 1, 1), dtype=jnp.float32) * init_value  # as in __init__
    bias = jnp.zeros((C,), dtype=jnp.float32)
    x = jax.random.normal(k1, (N, C, H, W), dtype=jnp.float32)

    out = jax.block_until_ready(layer_scale(x, weight, bias))
    assert out.shape == (N, C, H, W)
    assert jnp.allclose(out, _reference(x, weight, bias), atol=1e-6, rtol=1e-6)

    # --- Case 2: random params, small 7x7 maps (regime B: flattened C*hw) ---
    N2, C2, H2, W2 = 2, 16, 7, 7
    w2 = jax.random.normal(k2, (C2, 1, 1, 1), dtype=jnp.float32) * 1e-2
    b2 = jax.random.normal(k3, (C2,), dtype=jnp.float32) * 1e-2
    x2 = jax.random.normal(k4, (N2, C2, H2, W2), dtype=jnp.float32)

    out2 = jax.block_until_ready(layer_scale(x2, w2, b2))
    assert out2.shape == (N2, C2, H2, W2)
    assert jnp.allclose(out2, _reference(x2, w2, b2), atol=1e-6, rtol=1e-6)

    print("KERNEL_OK")
</pallas_src>

<mosaic_0001>
module attributes {stable_mosaic.version = 11 : i64} {
  func.func @_layerscale_kernel(%arg0: i32, %arg1: i32, %arg2: memref<8x256xf32, #tpu.memory_space<vmem>>, %arg3: memref<8x1xf32, #tpu.memory_space<vmem>>, %arg4: memref<8x1xf32, #tpu.memory_space<vmem>>, %arg5: memref<8x256xf32, #tpu.memory_space<vmem>>) attributes {dimension_semantics = [#tpu.dimension_semantics<parallel>, #tpu.dimension_semantics<parallel>], iteration_bounds = array<i64: 1, 1>, scalar_prefetch = 0 : i64, scratch_operands = 0 : i64, tpu.core_type = #tpu.core_type<tc>, window_params = [{transform_indices = @transform_0, window_bounds = array<i64: 8, 256>}, {transform_indices = @transform_1, window_bounds = array<i64: 8, 1>}, {transform_indices = @transform_2, window_bounds = array<i64: 8, 1>}, {transform_indices = @transform_3, window_bounds = array<i64: 8, 256>}]} {
    %c0 = arith.constant 0 : index
    %c0_0 = arith.constant 0 : index
    %0 = vector.load %arg2[%c0, %c0_0] : memref<8x256xf32, #tpu.memory_space<vmem>>, vector<8x256xf32>
    %c0_1 = arith.constant 0 : index
    %c0_2 = arith.constant 0 : index
    %1 = vector.load %arg3[%c0_1, %c0_2] : memref<8x1xf32, #tpu.memory_space<vmem>>, vector<8x1xf32>
    %2 = vector.broadcast %1 : vector<8x1xf32> to vector<8x256xf32>
    %3 = arith.mulf %0, %2 : vector<8x256xf32>
    %c0_3 = arith.constant 0 : index
    %c0_4 = arith.constant 0 : index
    %4 = vector.load %arg4[%c0_3, %c0_4] : memref<8x1xf32, #tpu.memory_space<vmem>>, vector<8x1xf32>
    %5 = vector.broadcast %4 : vector<8x1xf32> to vector<8x256xf32>
    %6 = arith.addf %3, %5 : vector<8x256xf32>
    %c0_5 = arith.constant 0 : index
    %c0_6 = arith.constant 0 : index
    %7 = vector.load %arg5[%c0_5, %c0_6] : memref<8x256xf32, #tpu.memory_space<vmem>>, vector<8x256xf32>
    tpu.vector_store %arg5[%c0_5, %c0_6], %6 {strides = array<i32>} : memref<8x256xf32, #tpu.memory_space<vmem>>, vector<8x256xf32>,
    return
  }
  func.func @transform_0(%arg0: i32, %arg1: i32) -> (i32, i32) {
    %c0_i32 = arith.constant 0 : i32
    return %arg0, %arg1 : i32, i32
  }
  func.func @transform_1(%arg0: i32, %arg1: i32) -> (i32, i32) {
    %c0_i32 = arith.constant 0 : i32
    %c0_i32_0 = arith.constant 0 : i32
    return %arg0, %c0_i32 : i32, i32
  }
  func.func @transform_2(%arg0: i32, %arg1: i32) -> (i32, i32) {
    %c0_i32 = arith.constant 0 : i32
    %c0_i32_0 = arith.constant 0 : i32
    return %arg0, %c0_i32 : i32, i32
  }
  func.func @transform_3(%arg0: i32, %arg1: i32) -> (i32, i32) {
    %c0_i32 = arith.constant 0 : i32
    return %arg0, %arg1 : i32, i32
  }
}

</mosaic_0001>

<llo_original>
// kernel: tpu_custom_call.1
$region0: #{tpu_custom_call.1}
  #allocation0 [shape = 'u32[]', space=smem, size = 0x4, offset = 0x4, fixed_abs, tag = 'smem constant byte address 0x4 - core index']
  #allocation1 [shape = 'u32[144,128]{1,0:T(1,128)}', space=vmem, size = 0x12000, scoped, tag = 'internal scratch']
  %s0 = inlined_call_operand.vmem [shape: f32[8,256], index: 0, kind: input, shape index: {}]
  %s1 = inlined_call_operand.vmem [shape: f32[8,1], index: 1, kind: input, shape index: {}]
  %s2 = inlined_call_operand.vmem [shape: f32[8,1], index: 2, kind: input, shape index: {}]
  %s3 = inlined_call_operand.hbm [shape: f32[8,256], index: 3, kind: output, shape index: {}]
  %s4 = sld [smem:[#allocation0]]
  $region22: #{tpu_custom_call.1} parent=0
    _
  %s6 = ssub.s32 1, %s4
  %s7 = scalar_select 0, %s6, %s4
  $region1: #{tpu_custom_call.1} parent=0
    #allocation2 [shape = 'u8[8192]{0}', space=vmem, size = 0x2000, scoped, tag = 'output window, operand 0, single buffered']
    #allocation3 [shape = 's32[1]{0}', space=sflag, size = 0x4, scoped, tag = 'scoped memory for tpu_custom_call.1']
    %8 = vsyncpa [#allocation3], 0
    // Predicated region
    $region2: #{tpu_custom_call.1} parent=1 // pred_check
      _
    $region3: #{tpu_custom_call.1} parent=1 // pred_check_branch
      %10 = sbr.rel (0) target = $region5
    $region4: #{tpu_custom_call.1} parent=1 // pred_region
      _
    $region5: #{tpu_custom_call.1} parent=1 // pred_fallthru
      _
    // Predicated region
    $region6: #{tpu_custom_call.1} parent=1 // pred_check
      _
    $region7: #{tpu_custom_call.1} parent=1 // pred_check_branch
      %12 = sbr.rel (0) target = $region9
    $region8: #{tpu_custom_call.1} parent=1 // pred_region
      _
    $region9: #{tpu_custom_call.1} parent=1 // pred_fallthru
      _
    // Predicated region
    $region10: #{tpu_custom_call.1} parent=1 // pred_check
      _
    $region11: #{tpu_custom_call.1} parent=1 // pred_check_branch
      %14 = sbr.rel (0) target = $region13
    $region12: #{tpu_custom_call.1} parent=1 // pred_region
      _
    $region13: #{tpu_custom_call.1} parent=1 // pred_fallthru
      _
    %v15 = vld [vmem:[%s0] sm:$0xff]
    %v16 = vld [vmem:[%s0 + $0x8] sm:$0xff]
    %v17 = vld [vmem:[%s1] sm:$0xff]
    %19 = vset.pattern.permute.xlu0 0
    %20 = vperm.xlu0 %19, %v17
    %v21 = vpop.permute.xlu0 %20
    %v23 = vmul.f32 %v15, %v21
    %v24 = vmul.f32 %v16, %v21
    %v25 = vld [vmem:[%s2] sm:$0xff]
    %27 = vset.pattern.permute.xlu0 0
    %28 = vperm.xlu0 %27, %v25
    %v29 = vpop.permute.xlu0 %28
    %v31 = vadd.f32 %v23, %v29
    %v32 = vadd.f32 %v24, %v29
    %33 = vst [vmem:[#allocation2] sm:$0xff] %v31
    %34 = vst [vmem:[#allocation2 + $0x8] sm:$0xff] %v32
    // Predicated region
    $region14: #{tpu_custom_call.1} parent=1 // pred_check
      _
    $region15: #{tpu_custom_call.1} parent=1 // pred_check_branch
      %36 = sbr.rel (0) target = $region17
    $region16: #{tpu_custom_call.1} parent=1 // pred_region
      %s38 = ssub.s32 256, 256
      %39 = vsyncadd [#allocation3], %s38
      %s41 = sshll.u32 [#allocation2], 4
      %s42 = int_to_ptr.vmem [resolvable:$true] %s41
      %44 = dma.vmem_to_hbm [thread:$0]  %s42, 256, %s3, [#allocation3]
    $region17: #{tpu_custom_call.1} parent=1 // pred_fallthru
      _
    // Predicated region
    $region18: #{tpu_custom_call.1} parent=1 // pred_check
      _
    $region19: #{tpu_custom_call.1} parent=1 // pred_check_branch
      %46 = sbr.rel (0) target = $region21
    $region20: #{tpu_custom_call.1} parent=1 // pred_region
      %47 = dma.done [#allocation3], 256
    $region21: #{tpu_custom_call.1} parent=1 // pred_fallthru
      _
    %48 = vsyncpa [#allocation3], 1

</llo_original>
